<compile_context>
chip_gen: v7x
topology: tpu7x:2x2x1
jax: 0.10.0
libtpu: 0.0.40
codegen_flags: <defaults>
</compile_context>

<pallas_src>
import functools

import jax
import jax.numpy as jnp
from jax import lax
from jax.experimental import pallas as pl
from jax.experimental.pallas import tpu as pltpu


def _round_up(x, m):
    return ((x + m - 1) // m) * m


def rnn_mlp_kernel(x_ref, w_ih_ref, w_hh_ref, b_rnn_ref,
                   w1_ref, b1_ref, w2_ref, b2_ref, o_ref, xp_ref):
    # x_ref:   [S, TB, E]   time-major input tile (VMEM)
    # w_ih:    [E, H]       [in, out] layout (prep-time transpose -> clean MXU lowering)
    # w_hh:    [H, H]       [in, out]
    # b_rnn:   [1, H]       (= b_ih + b_hh, folded at prep time)
    # w1:      [H, H2]      b1: [1, H2]
    # w2:      [H2, Cp]     b2: [1, Cp]   (Cp = num_class zero-padded to multiple of 128)
    # o_ref:   [TB, Cp]     lane-dense output tile
    # xp_ref:  [S, TB, H]   VMEM scratch holding the hoisted input projection
    S, TB, E = x_ref.shape
    H = w_hh_ref.shape[0]

    # ---- Hoisted input projection: one big MXU call + one bias broadcast, outside the
    #      serial time loop (removes a matmul + bias add from the per-step chain).
    x_all = x_ref[...].reshape(S * TB, E)          # free leading-dim collapse (TB % 8 == 0)
    xp = (jnp.dot(x_all, w_ih_ref[...], preferred_element_type=jnp.float32)
          + b_rnn_ref[...])                        # [S*TB, H]
    xp_ref[...] = xp.reshape(S, TB, H)

    w_hh = w_hh_ref[...]                           # resident in vregs across the loop

    def step(t, h):
        # Per-step serial chain: MXU (h @ w_hh) -> VPU add -> EUP tanh.
        return jnp.tanh(xp_ref[t]
                        + jnp.dot(h, w_hh, preferred_element_type=jnp.float32))

    h0 = jnp.zeros((TB, H), jnp.float32)           # nn.RNN default h0 = zeros
    h_n = lax.fori_loop(0, S, step, h0, unroll=(True if S <= 16 else 4))

    # h1 = relu(fc1(h_n)); z = fc2(h1)   (softmax intentionally NOT applied)
    h1 = jnp.maximum(
        jnp.dot(h_n, w1_ref[...], preferred_element_type=jnp.float32) + b1_ref[...], 0.0)
    z = jnp.dot(h1, w2_ref[...], preferred_element_type=jnp.float32) + b2_ref[...]
    o_ref[...] = z.astype(o_ref.dtype)


def prepare_params(w_ih, w_hh, b_ih, b_hh, w1, b1, w2, b2):
    """One-time parameter layout prep (call once at init, NOT per forward).

    - Transpose all weights to [in, out] so the kernel does plain [M,K] x [K,N] matmuls.
    - Fold the two RNN biases into one [1, H] row.
    - Zero-pad fc2 columns/bias to a multiple of 128 lanes (lane-dense output store).
    """
    f32 = jnp.float32
    H = w_hh.shape[0]
    H2 = w1.shape[0]
    C = w2.shape[0]
    Cp = _round_up(max(C, 1), 128)
    w2_t = jnp.zeros((H2, Cp), f32).at[:, :C].set(jnp.asarray(w2, f32).T)
    b2_p = jnp.zeros((1, Cp), f32).at[:, :C].set(jnp.asarray(b2, f32).reshape(1, C))
    return dict(
        w_ih=jnp.asarray(w_ih, f32).T,                                     # [E, H]
        w_hh=jnp.asarray(w_hh, f32).T,                                     # [H, H]
        b_rnn=(jnp.asarray(b_ih, f32) + jnp.asarray(b_hh, f32)).reshape(1, H),
        w1=jnp.asarray(w1, f32).T,                                         # [H, H2]
        b1=jnp.asarray(b1, f32).reshape(1, H2),
        w2=w2_t,                                                           # [H2, Cp]
        b2=b2_p,                                                           # [1, Cp]
    )


def _vmem_capacity_bytes():
    try:
        return int(pltpu.get_tpu_info().vmem_capacity_bytes)
    except Exception:
        return 64 << 20          # conservative fallback (v7x physical per-TC VMEM)


def _pick_batch_tile(B, S, E, H, Cp):
    """Largest batch tile (multiple of 8, <=512) that fits a per-generation VMEM budget,
    capped so that B >= 16 yields at least 2 grid steps (v7x dual-TC split)."""
    vmem_cap = _vmem_capacity_bytes()
    tile_budget = vmem_cap // 4                       # headroom for weights / pipeline
    per_row = (2 * S * E + S * H + 2 * Cp) * 4        # x dbl-buf + xp scratch + out dbl-buf
    tb = max(8, min(512, (tile_budget // per_row) // 8 * 8))
    b8 = _round_up(B, 8)
    tb = min(tb, b8)
    if b8 >= 16:
        tb = min(tb, _round_up(pl.cdiv(b8, 2), 8))    # >= 2 grid steps
    tb = max(8, (tb // 8) * 8)
    return tb, vmem_cap


@functools.partial(jax.jit, static_argnames=("num_class",))
def rnn_pretrained_vecs_1(x, params, *, num_class):
    """x: [B, S, E] (batch_first, like the PyTorch module). Returns logits [B, num_class]."""
    B, S, E = x.shape
    H = params["w_hh"].shape[0]
    H2 = params["w1"].shape[1]
    Cp = params["w2"].shape[1]

    TB, vmem_cap = _pick_batch_tile(B, S, E, H, Cp)
    B_full = _round_up(_round_up(B, 8), TB)
    nb = B_full // TB

    xf = jnp.asarray(x, jnp.float32)
    if B_full != B:
        xf = jnp.pad(xf, ((0, B_full - B), (0, 0), (0, 0)))
    # Time-major so the kernel indexes timestep t on the leading (untiled) axis.
    # TODO(synk): for very large B*S, keep batch-first x blocks and fix the layout of the
    # small xp tensor in-kernel (einshape) to avoid this extra HBM round-trip of x.
    x_tm = jnp.transpose(xf, (1, 0, 2))               # [S, B_full, E]

    needed = ((2 * S * TB * E + S * TB * H + 2 * TB * Cp)
              + 2 * (E * H + H * H + H + H * H2 + H2 + H2 * Cp + Cp)) * 4
    vmem_limit = int(min(vmem_cap, max(needed + (4 << 20), 32 << 20)))

    out = pl.pallas_call(
        rnn_mlp_kernel,
        out_shape=jax.ShapeDtypeStruct((B_full, Cp), jnp.float32),
        grid=(nb,),
        in_specs=[
            pl.BlockSpec((S, TB, E), lambda i: (0, i, 0)),   # x tile (batch-tiled)
            pl.BlockSpec((E, H),   lambda i: (0, 0)),        # weights/biases stay resident
            pl.BlockSpec((H, H),   lambda i: (0, 0)),
            pl.BlockSpec((1, H),   lambda i: (0, 0)),
            pl.BlockSpec((H, H2),  lambda i: (0, 0)),
            pl.BlockSpec((1, H2),  lambda i: (0, 0)),
            pl.BlockSpec((H2, Cp), lambda i: (0, 0)),
            pl.BlockSpec((1, Cp),  lambda i: (0, 0)),
        ],
        out_specs=pl.BlockSpec((TB, Cp), lambda i: (i, 0)),
        scratch_shapes=[pltpu.VMEM((S, TB, H), jnp.float32)],
        compiler_params=pltpu.CompilerParams(
            dimension_semantics=("parallel",),               # batch rows independent
            vmem_limit_bytes=vmem_limit),
    )(x_tm, params["w_ih"], params["w_hh"], params["b_rnn"],
      params["w1"], params["b1"], params["w2"], params["b2"])

    return out[:B, :num_class]


if __name__ == "__main__":
    # Small shapes consistent with the module.
    batch, seq, embed_dim, hidden_size, num_class = 8, 8, 32, 64, 8
    half = hidden_size // 2

    key = jax.random.PRNGKey(0)
    kx, k1, k2, k3, k4, k5, k6, k7, k8 = jax.random.split(key, 9)

    x = jax.random.normal(kx, (batch, seq, embed_dim), dtype=jnp.float32)
    # PyTorch parameter layouts: RNN weight_ih_l0 [H,E], weight_hh_l0 [H,H]; Linear [out,in].
    w_ih = jax.random.normal(k1, (hidden_size, embed_dim), jnp.float32) * 0.1
    w_hh = jax.random.normal(k2, (hidden_size, hidden_size), jnp.float32) * 0.1
    b_ih = jax.random.normal(k3, (hidden_size,), jnp.float32) * 0.1
    b_hh = jax.random.normal(k4, (hidden_size,), jnp.float32) * 0.1
    w1 = jax.random.normal(k5, (half, hidden_size), jnp.float32) * 0.1
    b1 = jax.random.normal(k6, (half,), jnp.float32) * 0.1
    w2 = jax.random.normal(k7, (num_class, half), jnp.float32) * 0.1
    b2 = jax.random.normal(k8, (num_class,), jnp.float32) * 0.1

    # One-time layout prep (hot path below does no weight transposes/reshapes/padding).
    params = prepare_params(w_ih, w_hh, b_ih, b_hh, w1, b1, w2, b2)

    out = jax.block_until_ready(rnn_pretrained_vecs_1(x, params, num_class=num_class))

    # Pure-JAX reference of the same forward semantics.
    h = jnp.zeros((batch, hidden_size), jnp.float32)
    for t in range(seq):
        h = jnp.tanh(x[:, t, :] @ w_ih.T + b_ih + h @ w_hh.T + b_hh)
    h1_ref = jnp.maximum(h @ w1.T + b1, 0.0)
    z_ref = h1_ref @ w2.T + b2

    assert out.shape == (batch, num_class)
    assert jnp.allclose(out, z_ref, atol=1e-4, rtol=1e-4), \
        float(jnp.max(jnp.abs(out - z_ref)))

    print("KERNEL_OK")
</pallas_src>

<mosaic_0001>
module attributes {stable_mosaic.version = 11 : i64} {
  func.func @rnn_mlp_kernel(%arg0: i32, %arg1: memref<8x8x32xf32, #tpu.memory_space<vmem>>, %arg2: memref<32x64xf32, #tpu.memory_space<vmem>>, %arg3: memref<64x64xf32, #tpu.memory_space<vmem>>, %arg4: memref<1x64xf32, #tpu.memory_space<vmem>>, %arg5: memref<64x32xf32, #tpu.memory_space<vmem>>, %arg6: memref<1x32xf32, #tpu.memory_space<vmem>>, %arg7: memref<32x128xf32, #tpu.memory_space<vmem>>, %arg8: memref<1x128xf32, #tpu.memory_space<vmem>>, %arg9: memref<8x128xf32, #tpu.memory_space<vmem>>, %arg10: memref<8x8x64xf32, #tpu.memory_space<vmem>>) attributes {dimension_semantics = [#tpu.dimension_semantics<parallel>], iteration_bounds = array<i64: 1>, scalar_prefetch = 0 : i64, scratch_operands = 1 : i64, tpu.core_type = #tpu.core_type<tc>, window_params = [{transform_indices = @transform_0, window_bounds = array<i64: 8, 8, 32>}, {pipeline_mode = #tpu.pipeline_mode<synchronous>, transform_indices = @transform_1, window_bounds = array<i64: 32, 64>}, {pipeline_mode = #tpu.pipeline_mode<synchronous>, transform_indices = @transform_2, window_bounds = array<i64: 64, 64>}, {pipeline_mode = #tpu.pipeline_mode<synchronous>, transform_indices = @transform_3, window_bounds = array<i64: 1, 64>}, {pipeline_mode = #tpu.pipeline_mode<synchronous>, transform_indices = @transform_4, window_bounds = array<i64: 64, 32>}, {pipeline_mode = #tpu.pipeline_mode<synchronous>, transform_indices = @transform_5, window_bounds = array<i64: 1, 32>}, {pipeline_mode = #tpu.pipeline_mode<synchronous>, transform_indices = @transform_6, window_bounds = array<i64: 32, 128>}, {pipeline_mode = #tpu.pipeline_mode<synchronous>, transform_indices = @transform_7, window_bounds = array<i64: 1, 128>}, {transform_indices = @transform_8, window_bounds = array<i64: 8, 128>}]} {
    %c0 = arith.constant 0 : index
    %c0_0 = arith.constant 0 : index
    %c0_1 = arith.constant 0 : index
    %0 = vector.load %arg1[%c0, %c0_0, %c0_1] : memref<8x8x32xf32, #tpu.memory_space<vmem>>, vector<8x8x32xf32>
    %1 = vector.shape_cast %0 : vector<8x8x32xf32> to vector<64x32xf32>
    %c0_2 = arith.constant 0 : index
    %c0_3 = arith.constant 0 : index
    %2 = vector.load %arg2[%c0_2, %c0_3] : memref<32x64xf32, #tpu.memory_space<vmem>>, vector<32x64xf32>
    %cst = arith.constant dense<0.000000e+00> : vector<64x64xf32>
    %3 = tpu.matmul %1, %2, %cst {dimension_numbers = #tpu.dot_dimension_numbers<[1], [0], [0], [1], [0, 0, 1, 1], [], []>} : vector<64x32xf32>, vector<32x64xf32>, vector<64x64xf32> -> vector<64x64xf32>
    %c0_4 = arith.constant 0 : index
    %c0_5 = arith.constant 0 : index
    %4 = vector.load %arg4[%c0_4, %c0_5] : memref<1x64xf32, #tpu.memory_space<vmem>>, vector<1x64xf32>
    %5 = vector.broadcast %4 : vector<1x64xf32> to vector<64x64xf32>
    %6 = arith.addf %3, %5 : vector<64x64xf32>
    %7 = vector.shape_cast %6 : vector<64x64xf32> to vector<8x8x64xf32>
    %c0_6 = arith.constant 0 : index
    %c0_7 = arith.constant 0 : index
    %c0_8 = arith.constant 0 : index
    %8 = vector.load %arg10[%c0_6, %c0_7, %c0_8] : memref<8x8x64xf32, #tpu.memory_space<vmem>>, vector<8x8x64xf32>
    tpu.vector_store %arg10[%c0_6, %c0_7, %c0_8], %7 {strides = array<i32>} : memref<8x8x64xf32, #tpu.memory_space<vmem>>, vector<8x8x64xf32>,
    %c0_9 = arith.constant 0 : index
    %c0_10 = arith.constant 0 : index
    %9 = vector.load %arg3[%c0_9, %c0_10] : memref<64x64xf32, #tpu.memory_space<vmem>>, vector<64x64xf32>
    %cst_11 = arith.constant 0.000000e+00 : f32
    %10 = vector.broadcast %cst_11 : f32 to vector<8x64xf32>
    %c0_i32 = arith.constant 0 : i32
    %11 = arith.index_cast %c0_i32 : i32 to index
    %c0_12 = arith.constant 0 : index
    %c0_13 = arith.constant 0 : index
    %12 = vector.load %arg10[%11, %c0_12, %c0_13] : memref<8x8x64xf32, #tpu.memory_space<vmem>>, vector<1x8x64xf32>
    %13 = vector.shape_cast %12 : vector<1x8x64xf32> to vector<8x64xf32>
    %cst_14 = arith.constant dense<0.000000e+00> : vector<8x64xf32>
    %14 = tpu.matmul %10, %9, %cst_14 {dimension_numbers = #tpu.dot_dimension_numbers<[1], [0], [0], [1], [0, 0, 1, 1], [], []>} : vector<8x64xf32>, vector<64x64xf32>, vector<8x64xf32> -> vector<8x64xf32>
    %15 = arith.addf %13, %14 : vector<8x64xf32>
    %16 = math.tanh %15 : vector<8x64xf32>
    %c1_i32 = arith.constant 1 : i32
    %17 = arith.index_cast %c1_i32 : i32 to index
    %c0_15 = arith.constant 0 : index
    %c0_16 = arith.constant 0 : index
    %18 = vector.load %arg10[%17, %c0_15, %c0_16] : memref<8x8x64xf32, #tpu.memory_space<vmem>>, vector<1x8x64xf32>
    %19 = vector.shape_cast %18 : vector<1x8x64xf32> to vector<8x64xf32>
    %cst_17 = arith.constant dense<0.000000e+00> : vector<8x64xf32>
    %20 = tpu.matmul %16, %9, %cst_17 {dimension_numbers = #tpu.dot_dimension_numbers<[1], [0], [0], [1], [0, 0, 1, 1], [], []>} : vector<8x64xf32>, vector<64x64xf32>, vector<8x64xf32> -> vector<8x64xf32>
    %21 = arith.addf %19, %20 : vector<8x64xf32>
    %22 = math.tanh %21 : vector<8x64xf32>
    %c2_i32 = arith.constant 2 : i32
    %23 = arith.index_cast %c2_i32 : i32 to index
    %c0_18 = arith.constant 0 : index
    %c0_19 = arith.constant 0 : index
    %24 = vector.load %arg10[%23, %c0_18, %c0_19] : memref<8x8x64xf32, #tpu.memory_space<vmem>>, vector<1x8x64xf32>
    %25 = vector.shape_cast %24 : vector<1x8x64xf32> to vector<8x64xf32>
    %cst_20 = arith.constant dense<0.000000e+00> : vector<8x64xf32>
    %26 = tpu.matmul %22, %9, %cst_20 {dimension_numbers = #tpu.dot_dimension_numbers<[1], [0], [0], [1], [0, 0, 1, 1], [], []>} : vector<8x64xf32>, vector<64x64xf32>, vector<8x64xf32> -> vector<8x64xf32>
    %27 = arith.addf %25, %26 : vector<8x64xf32>
    %28 = math.tanh %27 : vector<8x64xf32>
    %c3_i32 = arith.constant 3 : i32
    %29 = arith.index_cast %c3_i32 : i32 to index
    %c0_21 = arith.constant 0 : index
    %c0_22 = arith.constant 0 : index
    %30 = vector.load %arg10[%29, %c0_21, %c0_22] : memref<8x8x64xf32, #tpu.memory_space<vmem>>, vector<1x8x64xf32>
    %31 = vector.shape_cast %30 : vector<1x8x64xf32> to vector<8x64xf32>
    %cst_23 = arith.constant dense<0.000000e+00> : vector<8x64xf32>
    %32 = tpu.matmul %28, %9, %cst_23 {dimension_numbers = #tpu.dot_dimension_numbers<[1], [0], [0], [1], [0, 0, 1, 1], [], []>} : vector<8x64xf32>, vector<64x64xf32>, vector<8x64xf32> -> vector<8x64xf32>
    %33 = arith.addf %31, %32 : vector<8x64xf32>
    %34 = math.tanh %33 : vector<8x64xf32>
    %c4_i32 = arith.constant 4 : i32
    %35 = arith.index_cast %c4_i32 : i32 to index
    %c0_24 = arith.constant 0 : index
    %c0_25 = arith.constant 0 : index
    %36 = vector.load %arg10[%35, %c0_24, %c0_25] : memref<8x8x64xf32, #tpu.memory_space<vmem>>, vector<1x8x64xf32>
    %37 = vector.shape_cast %36 : vector<1x8x64xf32> to vector<8x64xf32>
    %cst_26 = arith.constant dense<0.000000e+00> : vector<8x64xf32>
    %38 = tpu.matmul %34, %9, %cst_26 {dimension_numbers = #tpu.dot_dimension_numbers<[1], [0], [0], [1], [0, 0, 1, 1], [], []>} : vector<8x64xf32>, vector<64x64xf32>, vector<8x64xf32> -> vector<8x64xf32>
    %39 = arith.addf %37, %38 : vector<8x64xf32>
    %40 = math.tanh %39 : vector<8x64xf32>
    %c5_i32 = arith.constant 5 : i32
    %41 = arith.index_cast %c5_i32 : i32 to index
    %c0_27 = arith.constant 0 : index
    %c0_28 = arith.constant 0 : index
    %42 = vector.load %arg10[%41, %c0_27, %c0_28] : memref<8x8x64xf32, #tpu.memory_space<vmem>>, vector<1x8x64xf32>
    %43 = vector.shape_cast %42 : vector<1x8x64xf32> to vector<8x64xf32>
    %cst_29 = arith.constant dense<0.000000e+00> : vector<8x64xf32>
    %44 = tpu.matmul %40, %9, %cst_29 {dimension_numbers = #tpu.dot_dimension_numbers<[1], [0], [0], [1], [0, 0, 1, 1], [], []>} : vector<8x64xf32>, vector<64x64xf32>, vector<8x64xf32> -> vector<8x64xf32>
    %45 = arith.addf %43, %44 : vector<8x64xf32>
    %46 = math.tanh %45 : vector<8x64xf32>
    %c6_i32 = arith.constant 6 : i32
    %47 = arith.index_cast %c6_i32 : i32 to index
    %c0_30 = arith.constant 0 : index
    %c0_31 = arith.constant 0 : index
    %48 = vector.load %arg10[%47, %c0_30, %c0_31] : memref<8x8x64xf32, #tpu.memory_space<vmem>>, vector<1x8x64xf32>
    %49 = vector.shape_cast %48 : vector<1x8x64xf32> to vector<8x64xf32>
    %cst_32 = arith.constant dense<0.000000e+00> : vector<8x64xf32>
    %50 = tpu.matmul %46, %9, %cst_32 {dimension_numbers = #tpu.dot_dimension_numbers<[1], [0], [0], [1], [0, 0, 1, 1], [], []>} : vector<8x64xf32>, vector<64x64xf32>, vector<8x64xf32> -> vector<8x64xf32>
    %51 = arith.addf %49, %50 : vector<8x64xf32>
    %52 = math.tanh %51 : vector<8x64xf32>
    %c7_i32 = arith.constant 7 : i32
    %53 = arith.index_cast %c7_i32 : i32 to index
    %c0_33 = arith.constant 0 : index
    %c0_34 = arith.constant 0 : index
    %54 = vector.load %arg10[%53, %c0_33, %c0_34] : memref<8x8x64xf32, #tpu.memory_space<vmem>>, vector<1x8x64xf32>
    %55 = vector.shape_cast %54 : vector<1x8x64xf32> to vector<8x64xf32>
    %cst_35 = arith.constant dense<0.000000e+00> : vector<8x64xf32>
    %56 = tpu.matmul %52, %9, %cst_35 {dimension_numbers = #tpu.dot_dimension_numbers<[1], [0], [0], [1], [0, 0, 1, 1], [], []>} : vector<8x64xf32>, vector<64x64xf32>, vector<8x64xf32> -> vector<8x64xf32>
    %57 = arith.addf %55, %56 : vector<8x64xf32>
    %58 = math.tanh %57 : vector<8x64xf32>
    %c8_i32 = arith.constant 8 : i32
    %c0_36 = arith.constant 0 : index
    %c0_37 = arith.constant 0 : index
    %59 = vector.load %arg5[%c0_36, %c0_37] : memref<64x32xf32, #tpu.memory_space<vmem>>, vector<64x32xf32>
    %cst_38 = arith.constant dense<0.000000e+00> : vector<8x32xf32>
    %60 = tpu.matmul %58, %59, %cst_38 {dimension_numbers = #tpu.dot_dimension_numbers<[1], [0], [0], [1], [0, 0, 1, 1], [], []>} : vector<8x64xf32>, vector<64x32xf32>, vector<8x32xf32> -> vector<8x32xf32>
    %c0_39 = arith.constant 0 : index
    %c0_40 = arith.constant 0 : index
    %61 = vector.load %arg6[%c0_39, %c0_40] : memref<1x32xf32, #tpu.memory_space<vmem>>, vector<1x32xf32>
    %62 = vector.broadcast %61 : vector<1x32xf32> to vector<8x32xf32>
    %63 = arith.addf %60, %62 : vector<8x32xf32>
    %cst_41 = arith.constant 0.000000e+00 : f32
    %64 = vector.broadcast %cst_41 : f32 to vector<8x32xf32>
    %65 = arith.maximumf %63, %64 : vector<8x32xf32>
    %c0_42 = arith.constant 0 : index
    %c0_43 = arith.constant 0 : index
    %66 = vector.load %arg7[%c0_42, %c0_43] : memref<32x128xf32, #tpu.memory_space<vmem>>, vector<32x128xf32>
    %cst_44 = arith.constant dense<0.000000e+00> : vector<8x128xf32>
    %67 = tpu.matmul %65, %66, %cst_44 {dimension_numbers = #tpu.dot_dimension_numbers<[1], [0], [0], [1], [0, 0, 1, 1], [], []>} : vector<8x32xf32>, vector<32x128xf32>, vector<8x128xf32> -> vector<8x128xf32>
    %c0_45 = arith.constant 0 : index
    %c0_46 = arith.constant 0 : index
    %68 = vector.load %arg8[%c0_45, %c0_46] : memref<1x128xf32, #tpu.memory_space<vmem>>, vector<1x128xf32>
    %69 = vector.broadcast %68 : vector<1x128xf32> to vector<8x128xf32>
    %70 = arith.addf %67, %69 : vector<8x128xf32>
    %c0_47 = arith.constant 0 : index
    %c0_48 = arith.constant 0 : index
    %71 = vector.load %arg9[%c0_47, %c0_48] : memref<8x128xf32, #tpu.memory_space<vmem>>, vector<8x128xf32>
    tpu.vector_store %arg9[%c0_47, %c0_48], %70 {strides = array<i32>} : memref<8x128xf32, #tpu.memory_space<vmem>>, vector<8x128xf32>,
    return
  }
  func.func @transform_0(%arg0: i32) -> (i32, i32, i32) {
    %c0_i32 = arith.constant 0 : i32
    %c0_i32_0 = arith.constant 0 : i32
    %c0_i32_1 = arith.constant 0 : i32
    return %c0_i32, %arg0, %c0_i32_0 : i32, i32, i32
  }
  func.func @transform_1(%arg0: i32) -> (i32, i32) {
    %c0_i32 = arith.constant 0 : i32
    %c0_i32_0 = arith.constant 0 : i32
    %c0_i32_1 = arith.constant 0 : i32
    return %c0_i32, %c0_i32_0 : i32, i32
  }
  func.func @transform_2(%arg0: i32) -> (i32, i32) {
    %c0_i32 = arith.constant 0 : i32
    %c0_i32_0 = arith.constant 0 : i32
    %c0_i32_1 = arith.constant 0 : i32
    return %c0_i32, %c0_i32_0 : i32, i32
  }
  func.func @transform_3(%arg0: i32) -> (i32, i32) {
    %c0_i32 = arith.constant 0 : i32
    %c0_i32_0 = arith.constant 0 : i32
    %c0_i32_1 = arith.constant 0 : i32
    return %c0_i32, %c0_i32_0 : i32, i32
  }
  func.func @transform_4(%arg0: i32) -> (i32, i32) {
    %c0_i32 = arith.constant 0 : i32
    %c0_i32_0 = arith.constant 0 : i32
    %c0_i32_1 = arith.constant 0 : i32
    return %c0_i32, %c0_i32_0 : i32, i32
  }
  func.func @transform_5(%arg0: i32) -> (i32, i32) {
    %c0_i32 = arith.constant 0 : i32
    %c0_i32_0 = arith.constant 0 : i32
    %c0_i32_1 = arith.constant 0 : i32
    return %c0_i32, %c0_i32_0 : i32, i32
  }
  func.func @transform_6(%arg0: i32) -> (i32, i32) {
    %c0_i32 = arith.constant 0 : i32
    %c0_i32_0 = arith.constant 0 : i32
    %c0_i32_1 = arith.constant 0 : i32
    return %c0_i32, %c0_i32_0 : i32, i32
  }
  func.func @transform_7(%arg0: i32) -> (i32, i32) {
    %c0_i32 = arith.constant 0 : i32
    %c0_i32_0 = arith.constant 0 : i32
    %c0_i32_1 = arith.constant 0 : i32
    return %c0_i32, %c0_i32_0 : i32, i32
  }
  func.func @transform_8(%arg0: i32) -> (i32, i32) {
    %c0_i32 = arith.constant 0 : i32
    %c0_i32_0 = arith.constant 0 : i32
    return %arg0, %c0_i32 : i32, i32
  }
}

</mosaic_0001>

<llo_original>
// kernel: rnn_pretrained_vecs_1.1
$region0: #{rnn_pretrained_vecs_1.1}
  #allocation0 [shape = 'u32[]', space=smem, size = 0x4, offset = 0x4, fixed_abs, tag = 'smem constant byte address 0x4 - core index']
  #allocation1 [shape = 'u32[144,128]{1,0:T(1,128)}', space=vmem, size = 0x12000, scoped, tag = 'internal scratch']
  #allocation2 [shape = 'f32[8,8,64]{2,1,0:T(8,128)}', space=vmem, size = 0x8000, scoped, tag = 'scratch operand']
  %s0 = inlined_call_operand.vmem [shape: f32[8,8,32], index: 0, kind: input, shape index: {}]
  %s1 = inlined_call_operand.vmem [shape: f32[32,64], index: 1, kind: input, shape index: {}]
  %s2 = inlined_call_operand.vmem [shape: f32[64,64], index: 2, kind: input, shape index: {}]
  %s3 = inlined_call_operand.vmem [shape: f32[1,64], index: 3, kind: input, shape index: {}]
  %s4 = inlined_call_operand.vmem [shape: f32[64,32], index: 4, kind: input, shape index: {}]
  %s5 = inlined_call_operand.vmem [shape: f32[1,32], index: 5, kind: input, shape index: {}]
  %s6 = inlined_call_operand.vmem [shape: f32[32,128], index: 6, kind: input, shape index: {}]
  %s7 = inlined_call_operand.vmem [shape: f32[1,128], index: 7, kind: input, shape index: {}]
  %s8 = inlined_call_operand.hbm [shape: f32[8,128], index: 8, kind: output, shape index: {}]
  %s9 = sld [smem:[#allocation0]]
  $region42: #{rnn_pretrained_vecs_1.1} parent=0
    _
  %s11 = ssub.s32 1, %s9
  %s12 = scalar_select 0, %s11, %s9
  $region1: #{rnn_pretrained_vecs_1.1} parent=0
    #allocation3 [shape = 'u8[4096]{0}', space=vmem, size = 0x1000, scoped, tag = 'output window, operand 0, single buffered']
    #allocation4 [shape = 's32[1]{0}', space=sflag, size = 0x4, scoped, tag = 'scoped memory for rnn_pretrained_vecs_1.1']
    %13 = vsyncpa [#allocation4], 0
    // Predicated region
    $region2: #{rnn_pretrained_vecs_1.1} parent=1 // pred_check
      _
    $region3: #{rnn_pretrained_vecs_1.1} parent=1 // pred_check_branch
      %15 = sbr.rel (0) target = $region5
    $region4: #{rnn_pretrained_vecs_1.1} parent=1 // pred_region
      _
    $region5: #{rnn_pretrained_vecs_1.1} parent=1 // pred_fallthru
      _
    // Predicated region
    $region6: #{rnn_pretrained_vecs_1.1} parent=1 // pred_check
      _
    $region7: #{rnn_pretrained_vecs_1.1} parent=1 // pred_check_branch
      %17 = sbr.rel (0) target = $region9
    $region8: #{rnn_pretrained_vecs_1.1} parent=1 // pred_region
      _
    $region9: #{rnn_pretrained_vecs_1.1} parent=1 // pred_fallthru
      _
    // Predicated region
    $region10: #{rnn_pretrained_vecs_1.1} parent=1 // pred_check
      _
    $region11: #{rnn_pretrained_vecs_1.1} parent=1 // pred_check_branch
      %19 = sbr.rel (0) target = $region13
    $region12: #{rnn_pretrained_vecs_1.1} parent=1 // pred_region
      _
    $region13: #{rnn_pretrained_vecs_1.1} parent=1 // pred_fallthru
      _
    // Predicated region
    $region14: #{rnn_pretrained_vecs_1.1} parent=1 // pred_check
      _
    $region15: #{rnn_pretrained_vecs_1.1} parent=1 // pred_check_branch
      %21 = sbr.rel (0) target = $region17
    $region16: #{rnn_pretrained_vecs_1.1} parent=1 // pred_region
      _
    $region17: #{rnn_pretrained_vecs_1.1} parent=1 // pred_fallthru
      _
    // Predicated region
    $region18: #{rnn_pretrained_vecs_1.1} parent=1 // pred_check
      _
    $region19: #{rnn_pretrained_vecs_1.1} parent=1 // pred_check_branch
      %23 = sbr.rel (0) target = $region21
    $region20: #{rnn_pretrained_vecs_1.1} parent=1 // pred_region
      _
    $region21: #{rnn_pretrained_vecs_1.1} parent=1 // pred_fallthru
      _
    // Predicated region
    $region22: #{rnn_pretrained_vecs_1.1} parent=1 // pred_check
      _
    $region23: #{rnn_pretrained_vecs_1.1} parent=1 // pred_check_branch
      %25 = sbr.rel (0) target = $region25
    $region24: #{rnn_pretrained_vecs_1.1} parent=1 // pred_region
      _
    $region25: #{rnn_pretrained_vecs_1.1} parent=1 // pred_fallthru
      _
    // Predicated region
    $region26: #{rnn_pretrained_vecs_1.1} parent=1 // pred_check
      _
    $region27: #{rnn_pretrained_vecs_1.1} parent=1 // pred_check_branch
      %27 = sbr.rel (0) target = $region29
    $region28: #{rnn_pretrained_vecs_1.1} parent=1 // pred_region
      _
    $region29: #{rnn_pretrained_vecs_1.1} parent=1 // pred_fallthru
      _
    // Predicated region
    $region30: #{rnn_pretrained_vecs_1.1} parent=1 // pred_check
      _
    $region31: #{rnn_pretrained_vecs_1.1} parent=1 // pred_check_branch
      %29 = sbr.rel (0) target = $region33
    $region32: #{rnn_pretrained_vecs_1.1} parent=1 // pred_region
      _
    $region33: #{rnn_pretrained_vecs_1.1} parent=1 // pred_fallthru
      _
    %v30 = vld [vmem:[%s0] sm:$0xff]
    %v31 = vld [vmem:[%s0 + $0x8] sm:$0xff]
    %v32 = vld [vmem:[%s0 + $0x10] sm:$0xff]
    %v33 = vld [vmem:[%s0 + $0x18] sm:$0xff]
    %v34 = vld [vmem:[%s0 + $0x20] sm:$0xff]
    %v35 = vld [vmem:[%s0 + $0x28] sm:$0xff]
    %v36 = vld [vmem:[%s0 + $0x30] sm:$0xff]
    %v37 = vld [vmem:[%s0 + $0x38] sm:$0xff]
    %v38 = vld [vmem:[%s1] sm:$0xff]
    %v39 = vld [vmem:[%s1 + $0x8] sm:$0xff]
    %v40 = vld [vmem:[%s1 + $0x10] sm:$0xff]
    %v41 = vld [vmem:[%s1 + $0x18] sm:$0xff]
    %v42 = vld [vmem:[%s3] sm:$0x1]
    %v44 = vlaneseq
    %v45 = vshrl.u32 %v44, 7
    %v46 = vsub.s32 0, %v45
    %v47 = vrot.slane %v42, %v46
    %vm49 = vcmask 261120
    %v51 = vsel %vm49, %v30, 0
    %v54 = vsel %vm49, %v31, 0
    %v57 = vsel %vm49, %v32, 0
    %v60 = vsel %vm49, %v33, 0
    %v63 = vsel %vm49, %v34, 0
    %v66 = vsel %vm49, %v35, 0
    %v69 = vsel %vm49, %v36, 0
    %v72 = vsel %vm49, %v37, 0
    %74 = vmatprep.subr.mxu0 0.0
    %75 = vmatpush1.msra.mxu0 %v38
    %76 = vmatprep.subr.mxu0 0.0
    %77 = vmatpush1.msra.mxu0 %v39
    %78 = vmatprep.subr.mxu0 0.0
    %79 = vmatpush1.msra.mxu0 %v40
    %80 = vmatprep.subr.mxu0 0.0
    %81 = vmatpush1.msra.mxu0 %v41
    %82 = vmatprep.subr.mxu0 0.0
    %83 = vmatpush1.msra.mxu0 0.0
    %84 = vmatprep.subr.mxu0 0.0
    %85 = vmatpush1.msra.mxu0 0.0
    %86 = vmatprep.subr.mxu0 0.0
    %87 = vmatpush1.msra.mxu0 0.0
    %88 = vmatprep.subr.mxu0 0.0
    %89 = vmatpush1.msra.mxu0 0.0
    %90 = vmatprep.subr.mxu0 0.0
    %91 = vmatpush1.msra.mxu0 0.0
    %92 = vmatprep.subr.mxu0 0.0
    %93 = vmatpush1.msra.mxu0 0.0
    %94 = vmatprep.subr.mxu0 0.0
    %95 = vmatpush1.msra.mxu0 0.0
    %96 = vmatprep.subr.mxu0 0.0
    %97 = vmatpush1.msra.mxu0 0.0
    %98 = vmatprep.subr.mxu0 0.0
    %99 = vmatpush1.msra.mxu0 0.0
    %100 = vmatprep.subr.mxu0 0.0
    %101 = vmatpush1.msra.mxu0 0.0
    %102 = vmatprep.subr.mxu0 0.0
    %103 = vmatpush1.msra.mxu0 0.0
    %104 = vmatprep.subr.mxu0 0.0
    %105 = vmatpush1.msra.mxu0 0.0
    %106 = vmatprep.subr.mxu0 0.0
    %107 = vmatpush1.msra.mxu0 0.0
    %108 = vmatprep.subr.mxu0 0.0
    %109 = vmatpush1.msra.mxu0 0.0
    %110 = vmatprep.subr.mxu0 0.0
    %111 = vmatpush1.msra.mxu0 0.0
    %112 = vmatprep.subr.mxu0 0.0
    %113 = vmatpush1.msra.mxu0 0.0
    %114 = vmatprep.subr.mxu0 0.0
    %115 = vmatpush1.msra.mxu0 0.0
    %116 = vmatprep.subr.mxu0 0.0
    %117 = vmatpush1.msra.mxu0 0.0
    %118 = vmatprep.subr.mxu0 0.0
    %119 = vmatpush1.msra.mxu0 0.0
    %120 = vmatprep.subr.mxu0 0.0
    %121 = vmatpush1.msra.mxu0 0.0
    %122 = vmatprep.subr.mxu0 0.0
    %123 = vmatpush1.msra.mxu0 0.0
    %124 = vmatprep.subr.mxu0 0.0
    %125 = vmatpush1.msra.mxu0 0.0
    %126 = vmatprep.subr.mxu0 0.0
    %127 = vmatpush1.msra.mxu0 0.0
    %128 = vmatprep.subr.mxu0 0.0
    %129 = vmatpush1.msra.mxu0 0.0
    %130 = vmatprep.subr.mxu0 0.0
    %131 = vmatpush1.msra.mxu0 0.0
    %132 = vmatprep.subr.mxu0 0.0
    %133 = vmatpush1.msra.mxu0 0.0
    %134 = vmatprep.subr.mxu0 0.0
    %135 = vmatpush1.msra.mxu0 0.0
    %136 = vmatprep.subr.mxu0 0.0
    %137 = vmatpush1.msra.mxu0 0.0
    %138 = vmatprep.mubr.f32.mxu0 0.0
    %139 = vmatmul.mubr.f32.gmra.mrb[0].mxu0 %v51
    %v140 = vpop.f32.mrb[0].mxu0
    %v141 = vadd.f32 %v47, %v140
    %v142 = vpop.f32.mrb[0].mxu0
    %143 = vmatprep.mubr.f32.mxu0 0.0
    %144 = vmatmul.mubr.f32.gmra.mrb[0].mxu0 %v54
    %v145 = vpop.f32.mrb[0].mxu0
    %v146 = vadd.f32 %v47, %v145
    %v147 = vpop.f32.mrb[0].mxu0
    %148 = vmatprep.mubr.f32.mxu0 0.0
    %149 = vmatmul.mubr.f32.gmra.mrb[0].mxu0 %v57
    %v150 = vpop.f32.mrb[0].mxu0
    %v151 = vadd.f32 %v47, %v150
    %v152 = vpop.f32.mrb[0].mxu0
    %153 = vmatprep.mubr.f32.mxu0 0.0
    %154 = vmatmul.mubr.f32.gmra.mrb[0].mxu0 %v60
    %v155 = vpop.f32.mrb[0].mxu0
    %v156 = vadd.f32 %v47, %v155
    %v157 = vpop.f32.mrb[0].mxu0
    %158 = vmatprep.mubr.f32.mxu0 0.0
    %159 = vmatmul.mubr.f32.gmra.mrb[0].mxu0 %v63
    %v160 = vpop.f32.mrb[0].mxu0
    %v161 = vadd.f32 %v47, %v160
    %v162 = vpop.f32.mrb[0].mxu0
    %163 = vmatprep.mubr.f32.mxu0 0.0
    %164 = vmatmul.mubr.f32.gmra.mrb[0].mxu0 %v66
    %v165 = vpop.f32.mrb[0].mxu0
    %v166 = vadd.f32 %v47, %v165
    %v167 = vpop.f32.mrb[0].mxu0
    %168 = vmatprep.mubr.f32.mxu0 0.0
    %169 = vmatmul.mubr.f32.gmra.mrb[0].mxu0 %v69
    %v170 = vpop.f32.mrb[0].mxu0
    %v171 = vadd.f32 %v47, %v170
    %v172 = vpop.f32.mrb[0].mxu0
    %173 = vmatprep.mubr.f32.mxu0 0.0
    %174 = vmatmul.mubr.f32.gmra.mrb[0].mxu0 %v72
    %v175 = vpop.f32.mrb[0].mxu0
    %v176 = vadd.f32 %v47, %v175
    %v177 = vpop.f32.mrb[0].mxu0
    %178 = vdwg.mxu0
    %vm179 = vcmask 523264
    %180 = vst.msk [vmem:[#allocation2] sm:$0xff] %vm179, %v141
    %181 = vst.msk [vmem:[#allocation2 + $0x8] sm:$0xff] %vm179, %v146
    %182 = vst.msk [vmem:[#allocation2 + $0x10] sm:$0xff] %vm179, %v151
    %183 = vst.msk [vmem:[#allocation2 + $0x18] sm:$0xff] %vm179, %v156
    %184 = vst.msk [vmem:[#allocation2 + $0x20] sm:$0xff] %vm179, %v161
    %185 = vst.msk [vmem:[#allocation2 + $0x28] sm:$0xff] %vm179, %v166
    %186 = vst.msk [vmem:[#allocation2 + $0x30] sm:$0xff] %vm179, %v171
    %187 = vst.msk [vmem:[#allocation2 + $0x38] sm:$0xff] %vm179, %v176
    %v188 = vld [vmem:[%s2] sm:$0xff]
    %v189 = vld [vmem:[%s2 + $0x8] sm:$0xff]
    %v190 = vld [vmem:[%s2 + $0x10] sm:$0xff]
    %v191 = vld [vmem:[%s2 + $0x18] sm:$0xff]
    %v192 = vld [vmem:[%s2 + $0x20] sm:$0xff]
    %v193 = vld [vmem:[%s2 + $0x28] sm:$0xff]
    %v194 = vld [vmem:[%s2 + $0x30] sm:$0xff]
    %v195 = vld [vmem:[%s2 + $0x38] sm:$0xff]
    %v196 = vld [vmem:[#allocation2] sm:$0xff]
    %v198 = vsel %vm179, 0.0, 0
    %200 = vmatprep.subr.mxu0 0.0
    %201 = vmatpush1.msra.mxu0 %v188
    %202 = vmatprep.subr.mxu0 0.0
    %203 = vmatpush1.msra.mxu0 %v189
    %204 = vmatprep.subr.mxu0 0.0
    %205 = vmatpush1.msra.mxu0 %v190
    %206 = vmatprep.subr.mxu0 0.0
    %207 = vmatpush1.msra.mxu0 %v191
    %208 = vmatprep.subr.mxu0 0.0
    %209 = vmatpush1.msra.mxu0 %v192
    %210 = vmatprep.subr.mxu0 0.0
    %211 = vmatpush1.msra.mxu0 %v193
    %212 = vmatprep.subr.mxu0 0.0
    %213 = vmatpush1.msra.mxu0 %v194
    %214 = vmatprep.subr.mxu0 0.0
    %215 = vmatpush1.msra.mxu0 %v195
    %216 = vmatprep.subr.mxu0 0.0
    %217 = vmatpush1.msra.mxu0 0.0
    %218 = vmatprep.subr.mxu0 0.0
    %219 = vmatpush1.msra.mxu0 0.0
    %220 = vmatprep.subr.mxu0 0.0
    %221 = vmatpush1.msra.mxu0 0.0
    %222 = vmatprep.subr.mxu0 0.0
    %223 = vmatpush1.msra.mxu0 0.0
    %224 = vmatprep.subr.mxu0 0.0
    %225 = vmatpush1.msra.mxu0 0.0
    %226 = vmatprep.subr.mxu0 0.0
    %227 = vmatpush1.msra.mxu0 0.0
    %228 = vmatprep.subr.mxu0 0.0
    %229 = vmatpush1.msra.mxu0 0.0
    %230 = vmatprep.subr.mxu0 0.0
    %231 = vmatpush1.msra.mxu0 0.0
    %232 = vmatprep.subr.mxu0 0.0
    %233 = vmatpush1.msra.mxu0 0.0
    %234 = vmatprep.subr.mxu0 0.0
    %235 = vmatpush1.msra.mxu0 0.0
    %236 = vmatprep.subr.mxu0 0.0
    %237 = vmatpush1.msra.mxu0 0.0
    %238 = vmatprep.subr.mxu0 0.0
    %239 = vmatpush1.msra.mxu0 0.0
    %240 = vmatprep.subr.mxu0 0.0
    %241 = vmatpush1.msra.mxu0 0.0
    %242 = vmatprep.subr.mxu0 0.0
    %243 = vmatpush1.msra.mxu0 0.0
    %244 = vmatprep.subr.mxu0 0.0
    %245 = vmatpush1.msra.mxu0 0.0
    %246 = vmatprep.subr.mxu0 0.0
    %247 = vmatpush1.msra.mxu0 0.0
    %248 = vmatprep.subr.mxu0 0.0
    %249 = vmatpush1.msra.mxu0 0.0
    %250 = vmatprep.subr.mxu0 0.0
    %251 = vmatpush1.msra.mxu0 0.0
    %252 = vmatprep.subr.mxu0 0.0
    %253 = vmatpush1.msra.mxu0 0.0
    %254 = vmatprep.subr.mxu0 0.0
    %255 = vmatpush1.msra.mxu0 0.0
    %256 = vmatprep.subr.mxu0 0.0
    %257 = vmatpush1.msra.mxu0 0.0
    %258 = vmatprep.subr.mxu0 0.0
    %259 = vmatpush1.msra.mxu0 0.0
    %260 = vmatprep.subr.mxu0 0.0
    %261 = vmatpush1.msra.mxu0 0.0
    %262 = vmatprep.subr.mxu0 0.0
    %263 = vmatpush1.msra.mxu0 0.0
    %264 = vmatprep.mubr.f32.mxu0 0.0
    %265 = vmatmul.mubr.f32.gmra.mrb[0].mxu0 %v198
    %v266 = vpop.f32.mrb[0].mxu0
    %v267 = vadd.f32 0.0, %v266
    %v268 = vpop.f32.mrb[0].mxu0
    %269 = vdwg.mxu0
    %v270 = vadd.f32 %v196, %v267
    %v271 = vtanh.pop %v270
    %s272 = scalar_lea.vmem [#allocation2], 8
    %v273 = vld [vmem:[%s272] sm:$0xff]
    %v275 = vsel %vm179, %v271, 0
    %277 = vmatprep.subr.mxu0 0.0
    %278 = vmatpush1.msra.mxu0 %v188
    %279 = vmatprep.subr.mxu0 0.0
    %280 = vmatpush1.msra.mxu0 %v189
    %281 = vmatprep.subr.mxu0 0.0
    %282 = vmatpush1.msra.mxu0 %v190
    %283 = vmatprep.subr.mxu0 0.0
    %284 = vmatpush1.msra.mxu0 %v191
    %285 = vmatprep.subr.mxu0 0.0
    %286 = vmatpush1.msra.mxu0 %v192
    %287 = vmatprep.subr.mxu0 0.0
    %288 = vmatpush1.msra.mxu0 %v193
    %289 = vmatprep.subr.mxu0 0.0
    %290 = vmatpush1.msra.mxu0 %v194
    %291 = vmatprep.subr.mxu0 0.0
    %292 = vmatpush1.msra.mxu0 %v195
    %293 = vmatprep.subr.mxu0 0.0
    %294 = vmatpush1.msra.mxu0 0.0
    %295 = vmatprep.subr.mxu0 0.0
    %296 = vmatpush1.msra.mxu0 0.0
    %297 = vmatprep.subr.mxu0 0.0
    %298 = vmatpush1.msra.mxu0 0.0
    %299 = vmatprep.subr.mxu0 0.0
    %300 = vmatpush1.msra.mxu0 0.0
    %301 = vmatprep.subr.mxu0 0.0
    %302 = vmatpush1.msra.mxu0 0.0
    %303 = vmatprep.subr.mxu0 0.0
    %304 = vmatpush1.msra.mxu0 0.0
    %305 = vmatprep.subr.mxu0 0.0
    %306 = vmatpush1.msra.mxu0 0.0
    %307 = vmatprep.subr.mxu0 0.0
    %308 = vmatpush1.msra.mxu0 0.0
    %309 = vmatprep.subr.mxu0 0.0
    %310 = vmatpush1.msra.mxu0 0.0
    %311 = vmatprep.subr.mxu0 0.0
    %312 = vmatpush1.msra.mxu0 0.0
    %313 = vmatprep.subr.mxu0 0.0
    %314 = vmatpush1.msra.mxu0 0.0
    %315 = vmatprep.subr.mxu0 0.0
    %316 = vmatpush1.msra.mxu0 0.0
    %317 = vmatprep.subr.mxu0 0.0
    %318 = vmatpush1.msra.mxu0 0.0
    %319 = vmatprep.subr.mxu0 0.0
    %320 = vmatpush1.msra.mxu0 0.0
    %321 = vmatprep.subr.mxu0 0.0
    %322 = vmatpush1.msra.mxu0 0.0
    %323 = vmatprep.subr.mxu0 0.0
    %324 = vmatpush1.msra.mxu0 0.0
    %325 = vmatprep.subr.mxu0 0.0
    %326 = vmatpush1.msra.mxu0 0.0
    %327 = vmatprep.subr.mxu0 0.0
    %328 = vmatpush1.msra.mxu0 0.0
    %329 = vmatprep.subr.mxu0 0.0
    %330 = vmatpush1.msra.mxu0 0.0
    %331 = vmatprep.subr.mxu0 0.0
    %332 = vmatpush1.msra.mxu0 0.0
    %333 = vmatprep.subr.mxu0 0.0
    %334 = vmatpush1.msra.mxu0 0.0
    %335 = vmatprep.subr.mxu0 0.0
    %336 = vmatpush1.msra.mxu0 0.0
    %337 = vmatprep.subr.mxu0 0.0
    %338 = vmatpush1.msra.mxu0 0.0
    %339 = vmatprep.subr.mxu0 0.0
    %340 = vmatpush1.msra.mxu0 0.0
    %341 = vmatprep.mubr.f32.mxu0 0.0
    %342 = vmatmul.mubr.f32.gmra.mrb[0].mxu0 %v275
    %v343 = vpop.f32.mrb[0].mxu0
    %v344 = vadd.f32 0.0, %v343
    %v345 = vpop.f32.mrb[0].mxu0
    %346 = vdwg.mxu0
    %v347 = vadd.f32 %v273, %v344
    %v348 = vtanh.pop %v347
    %s349 = scalar_lea.vmem [#allocation2], 16
    %v350 = vld [vmem:[%s349] sm:$0xff]
    %v352 = vsel %vm179, %v348, 0
    %354 = vmatprep.subr.mxu0 0.0
    %355 = vmatpush1.msra.mxu0 %v188
    %356 = vmatprep.subr.mxu0 0.0
    %357 = vmatpush1.msra.mxu0 %v189
    %358 = vmatprep.subr.mxu0 0.0
    %359 = vmatpush1.msra.mxu0 %v190
    %360 = vmatprep.subr.mxu0 0.0
    %361 = vmatpush1.msra.mxu0 %v191
    %362 = vmatprep.subr.mxu0 0.0
    %363 = vmatpush1.msra.mxu0 %v192
    %364 = vmatprep.subr.mxu0 0.0
    %365 = vmatpush1.msra.mxu0 %v193
    %366 = vmatprep.subr.mxu0 0.0
    %367 = vmatpush1.msra.mxu0 %v194
    %368 = vmatprep.subr.mxu0 0.0
    %369 = vmatpush1.msra.mxu0 %v195
    %370 = vmatprep.subr.mxu0 0.0
    %371 = vmatpush1.msra.mxu0 0.0
    %372 = vmatprep.subr.mxu0 0.0
    %373 = vmatpush1.msra.mxu0 0.0
    %374 = vmatprep.subr.mxu0 0.0
    %375 = vmatpush1.msra.mxu0 0.0
    %376 = vmatprep.subr.mxu0 0.0
    %377 = vmatpush1.msra.mxu0 0.0
    %378 = vmatprep.subr.mxu0 0.0
    %379 = vmatpush1.msra.mxu0 0.0
    %380 = vmatprep.subr.mxu0 0.0
    %381 = vmatpush1.msra.mxu0 0.0
    %382 = vmatprep.subr.mxu0 0.0
    %383 = vmatpush1.msra.mxu0 0.0
    %384 = vmatprep.subr.mxu0 0.0
    %385 = vmatpush1.msra.mxu0 0.0
    %386 = vmatprep.subr.mxu0 0.0
    %387 = vmatpush1.msra.mxu0 0.0
    %388 = vmatprep.subr.mxu0 0.0
    %389 = vmatpush1.msra.mxu0 0.0
    %390 = vmatprep.subr.mxu0 0.0
    %391 = vmatpush1.msra.mxu0 0.0
    %392 = vmatprep.subr.mxu0 0.0
    %393 = vmatpush1.msra.mxu0 0.0
    %394 = vmatprep.subr.mxu0 0.0
    %395 = vmatpush1.msra.mxu0 0.0
    %396 = vmatprep.subr.mxu0 0.0
    %397 = vmatpush1.msra.mxu0 0.0
    %398 = vmatprep.subr.mxu0 0.0
    %399 = vmatpush1.msra.mxu0 0.0
    %400 = vmatprep.subr.mxu0 0.0
    %401 = vmatpush1.msra.mxu0 0.0
    %402 = vmatprep.subr.mxu0 0.0
    %403 = vmatpush1.msra.mxu0 0.0
    %404 = vmatprep.subr.mxu0 0.0
    %405 = vmatpush1.msra.mxu0 0.0
    %406 = vmatprep.subr.mxu0 0.0
    %407 = vmatpush1.msra.mxu0 0.0
    %408 = vmatprep.subr.mxu0 0.0
    %409 = vmatpush1.msra.mxu0 0.0
    %410 = vmatprep.subr.mxu0 0.0
    %411 = vmatpush1.msra.mxu0 0.0
    %412 = vmatprep.subr.mxu0 0.0
    %413 = vmatpush1.msra.mxu0 0.0
    %414 = vmatprep.subr.mxu0 0.0
    %415 = vmatpush1.msra.mxu0 0.0
    %416 = vmatprep.subr.mxu0 0.0
    %417 = vmatpush1.msra.mxu0 0.0
    %418 = vmatprep.mubr.f32.mxu0 0.0
    %419 = vmatmul.mubr.f32.gmra.mrb[0].mxu0 %v352
    %v420 = vpop.f32.mrb[0].mxu0
    %v421 = vadd.f32 0.0, %v420
    %v422 = vpop.f32.mrb[0].mxu0
    %423 = vdwg.mxu0
    %v424 = vadd.f32 %v350, %v421
    %v425 = vtanh.pop %v424
    %s426 = scalar_lea.vmem [#allocation2], 24
    %v427 = vld [vmem:[%s426] sm:$0xff]
    %v429 = vsel %vm179, %v425, 0
    %431 = vmatprep.subr.mxu0 0.0
    %432 = vmatpush1.msra.mxu0 %v188
    %433 = vmatprep.subr.mxu0 0.0
    %434 = vmatpush1.msra.mxu0 %v189
    %435 = vmatprep.subr.mxu0 0.0
    %436 = vmatpush1.msra.mxu0 %v190
    %437 = vmatprep.subr.mxu0 0.0
    %438 = vmatpush1.msra.mxu0 %v191
    %439 = vmatprep.subr.mxu0 0.0
    %440 = vmatpush1.msra.mxu0 %v192
    %441 = vmatprep.subr.mxu0 0.0
    %442 = vmatpush1.msra.mxu0 %v193
    %443 = vmatprep.subr.mxu0 0.0
    %444 = vmatpush1.msra.mxu0 %v194
    %445 = vmatprep.subr.mxu0 0.0
    %446 = vmatpush1.msra.mxu0 %v195
    %447 = vmatprep.subr.mxu0 0.0
    %448 = vmatpush1.msra.mxu0 0.0
    %449 = vmatprep.subr.mxu0 0.0
    %450 = vmatpush1.msra.mxu0 0.0
    %451 = vmatprep.subr.mxu0 0.0
    %452 = vmatpush1.msra.mxu0 0.0
    %453 = vmatprep.subr.mxu0 0.0
    %454 = vmatpush1.msra.mxu0 0.0
    %455 = vmatprep.subr.mxu0 0.0
    %456 = vmatpush1.msra.mxu0 0.0
    %457 = vmatprep.subr.mxu0 0.0
    %458 = vmatpush1.msra.mxu0 0.0
    %459 = vmatprep.subr.mxu0 0.0
    %460 = vmatpush1.msra.mxu0 0.0
    %461 = vmatprep.subr.mxu0 0.0
    %462 = vmatpush1.msra.mxu0 0.0
    %463 = vmatprep.subr.mxu0 0.0
    %464 = vmatpush1.msra.mxu0 0.0
    %465 = vmatprep.subr.mxu0 0.0
    %466 = vmatpush1.msra.mxu0 0.0
    %467 = vmatprep.subr.mxu0 0.0
    %468 = vmatpush1.msra.mxu0 0.0
    %469 = vmatprep.subr.mxu0 0.0
    %470 = vmatpush1.msra.mxu0 0.0
    %471 = vmatprep.subr.mxu0 0.0
    %472 = vmatpush1.msra.mxu0 0.0
    %473 = vmatprep.subr.mxu0 0.0
    %474 = vmatpush1.msra.mxu0 0.0
    %475 = vmatprep.subr.mxu0 0.0
    %476 = vmatpush1.msra.mxu0 0.0
    %477 = vmatprep.subr.mxu0 0.0
    %478 = vmatpush1.msra.mxu0 0.0
    %479 = vmatprep.subr.mxu0 0.0
    %480 = vmatpush1.msra.mxu0 0.0
    %481 = vmatprep.subr.mxu0 0.0
    %482 = vmatpush1.msra.mxu0 0.0
    %483 = vmatprep.subr.mxu0 0.0
    %484 = vmatpush1.msra.mxu0 0.0
    %485 = vmatprep.subr.mxu0 0.0
    %486 = vmatpush1.msra.mxu0 0.0
    %487 = vmatprep.subr.mxu0 0.0
    %488 = vmatpush1.msra.mxu0 0.0
    %489 = vmatprep.subr.mxu0 0.0
    %490 = vmatpush1.msra.mxu0 0.0
    %491 = vmatprep.subr.mxu0 0.0
    %492 = vmatpush1.msra.mxu0 0.0
    %493 = vmatprep.subr.mxu0 0.0
    %494 = vmatpush1.msra.mxu0 0.0
    %495 = vmatprep.mubr.f32.mxu0 0.0
    %496 = vmatmul.mubr.f32.gmra.mrb[0].mxu0 %v429
    %v497 = vpop.f32.mrb[0].mxu0
    %v498 = vadd.f32 0.0, %v497
    %v499 = vpop.f32.mrb[0].mxu0
    %500 = vdwg.mxu0
    %v501 = vadd.f32 %v427, %v498
    %v502 = vtanh.pop %v501
    %s503 = scalar_lea.vmem [#allocation2], 32
    %v504 = vld [vmem:[%s503] sm:$0xff]
    %v506 = vsel %vm179, %v502, 0
    %508 = vmatprep.subr.mxu0 0.0
    %509 = vmatpush1.msra.mxu0 %v188
    %510 = vmatprep.subr.mxu0 0.0
    %511 = vmatpush1.msra.mxu0 %v189
    %512 = vmatprep.subr.mxu0 0.0
    %513 = vmatpush1.msra.mxu0 %v190
    %514 = vmatprep.subr.mxu0 0.0
    %515 = vmatpush1.msra.mxu0 %v191
    %516 = vmatprep.subr.mxu0 0.0
    %517 = vmatpush1.msra.mxu0 %v192
    %518 = vmatprep.subr.mxu0 0.0
    %519 = vmatpush1.msra.mxu0 %v193
    %520 = vmatprep.subr.mxu0 0.0
    %521 = vmatpush1.msra.mxu0 %v194
    %522 = vmatprep.subr.mxu0 0.0
    %523 = vmatpush1.msra.mxu0 %v195
    %524 = vmatprep.subr.mxu0 0.0
    %525 = vmatpush1.msra.mxu0 0.0
    %526 = vmatprep.subr.mxu0 0.0
    %527 = vmatpush1.msra.mxu0 0.0
    %528 = vmatprep.subr.mxu0 0.0
    %529 = vmatpush1.msra.mxu0 0.0
    %530 = vmatprep.subr.mxu0 0.0
    %531 = vmatpush1.msra.mxu0 0.0
    %532 = vmatprep.subr.mxu0 0.0
    %533 = vmatpush1.msra.mxu0 0.0
    %534 = vmatprep.subr.mxu0 0.0
    %535 = vmatpush1.msra.mxu0 0.0
    %536 = vmatprep.subr.mxu0 0.0
    %537 = vmatpush1.msra.mxu0 0.0
    %538 = vmatprep.subr.mxu0 0.0
    %539 = vmatpush1.msra.mxu0 0.0
    %540 = vmatprep.subr.mxu0 0.0
    %541 = vmatpush1.msra.mxu0 0.0
    %542 = vmatprep.subr.mxu0 0.0
    %543 = vmatpush1.msra.mxu0 0.0
    %544 = vmatprep.subr.mxu0 0.0
    %545 = vmatpush1.msra.mxu0 0.0
    %546 = vmatprep.subr.mxu0 0.0
    %547 = vmatpush1.msra.mxu0 0.0
    %548 = vmatprep.subr.mxu0 0.0
    %549 = vmatpush1.msra.mxu0 0.0
    %550 = vmatprep.subr.mxu0 0.0
    %551 = vmatpush1.msra.mxu0 0.0
    %552 = vmatprep.subr.mxu0 0.0
    %553 = vmatpush1.msra.mxu0 0.0
    %554 = vmatprep.subr.mxu0 0.0
    %555 = vmatpush1.msra.mxu0 0.0
    %556 = vmatprep.subr.mxu0 0.0
    %557 = vmatpush1.msra.mxu0 0.0
    %558 = vmatprep.subr.mxu0 0.0
    %559 = vmatpush1.msra.mxu0 0.0
    %560 = vmatprep.subr.mxu0 0.0
    %561 = vmatpush1.msra.mxu0 0.0
    %562 = vmatprep.subr.mxu0 0.0
    %563 = vmatpush1.msra.mxu0 0.0
    %564 = vmatprep.subr.mxu0 0.0
    %565 = vmatpush1.msra.mxu0 0.0
    %566 = vmatprep.subr.mxu0 0.0
    %567 = vmatpush1.msra.mxu0 0.0
    %568 = vmatprep.subr.mxu0 0.0
    %569 = vmatpush1.msra.mxu0 0.0
    %570 = vmatprep.subr.mxu0 0.0
    %571 = vmatpush1.msra.mxu0 0.0
    %572 = vmatprep.mubr.f32.mxu0 0.0
    %573 = vmatmul.mubr.f32.gmra.mrb[0].mxu0 %v506
    %v574 = vpop.f32.mrb[0].mxu0
    %v575 = vadd.f32 0.0, %v574
    %v576 = vpop.f32.mrb[0].mxu0
    %577 = vdwg.mxu0
    %v578 = vadd.f32 %v504, %v575
    %v579 = vtanh.pop %v578
    %s580 = scalar_lea.vmem [#allocation2], 40
    %v581 = vld [vmem:[%s580] sm:$0xff]
    %v583 = vsel %vm179, %v579, 0
    %585 = vmatprep.subr.mxu0 0.0
    %586 = vmatpush1.msra.mxu0 %v188
    %587 = vmatprep.subr.mxu0 0.0
    %588 = vmatpush1.msra.mxu0 %v189
    %589 = vmatprep.subr.mxu0 0.0
    %590 = vmatpush1.msra.mxu0 %v190
    %591 = vmatprep.subr.mxu0 0.0
    %592 = vmatpush1.msra.mxu0 %v191
    %593 = vmatprep.subr.mxu0 0.0
    %594 = vmatpush1.msra.mxu0 %v192
    %595 = vmatprep.subr.mxu0 0.0
    %596 = vmatpush1.msra.mxu0 %v193
    %597 = vmatprep.subr.mxu0 0.0
    %598 = vmatpush1.msra.mxu0 %v194
    %599 = vmatprep.subr.mxu0 0.0
    %600 = vmatpush1.msra.mxu0 %v195
    %601 = vmatprep.subr.mxu0 0.0
    %602 = vmatpush1.msra.mxu0 0.0
    %603 = vmatprep.subr.mxu0 0.0
    %604 = vmatpush1.msra.mxu0 0.0
    %605 = vmatprep.subr.mxu0 0.0
    %606 = vmatpush1.msra.mxu0 0.0
    %607 = vmatprep.subr.mxu0 0.0
    %608 = vmatpush1.msra.mxu0 0.0
    %609 = vmatprep.subr.mxu0 0.0
    %610 = vmatpush1.msra.mxu0 0.0
    %611 = vmatprep.subr.mxu0 0.0
    %612 = vmatpush1.msra.mxu0 0.0
    %613 = vmatprep.subr.mxu0 0.0
    %614 = vmatpush1.msra.mxu0 0.0
    %615 = vmatprep.subr.mxu0 0.0
    %616 = vmatpush1.msra.mxu0 0.0
    %617 = vmatprep.subr.mxu0 0.0
    %618 = vmatpush1.msra.mxu0 0.0
    %619 = vmatprep.subr.mxu0 0.0
    %620 = vmatpush1.msra.mxu0 0.0
    %621 = vmatprep.subr.mxu0 0.0
    %622 = vmatpush1.msra.mxu0 0.0
    %623 = vmatprep.subr.mxu0 0.0
    %624 = vmatpush1.msra.mxu0 0.0
    %625 = vmatprep.subr.mxu0 0.0
    %626 = vmatpush1.msra.mxu0 0.0
    %627 = vmatprep.subr.mxu0 0.0
    %628 = vmatpush1.msra.mxu0 0.0
    %629 = vmatprep.subr.mxu0 0.0
    %630 = vmatpush1.msra.mxu0 0.0
    %631 = vmatprep.subr.mxu0 0.0
    %632 = vmatpush1.msra.mxu0 0.0
    %633 = vmatprep.subr.mxu0 0.0
    %634 = vmatpush1.msra.mxu0 0.0
    %635 = vmatprep.subr.mxu0 0.0
    %636 = vmatpush1.msra.mxu0 0.0
    %637 = vmatprep.subr.mxu0 0.0
    %638 = vmatpush1.msra.mxu0 0.0
    %639 = vmatprep.subr.mxu0 0.0
    %640 = vmatpush1.msra.mxu0 0.0
    %641 = vmatprep.subr.mxu0 0.0
    %642 = vmatpush1.msra.mxu0 0.0
    %643 = vmatprep.subr.mxu0 0.0
    %644 = vmatpush1.msra.mxu0 0.0
    %645 = vmatprep.subr.mxu0 0.0
    %646 = vmatpush1.msra.mxu0 0.0
    %647 = vmatprep.subr.mxu0 0.0
    %648 = vmatpush1.msra.mxu0 0.0
    %649 = vmatprep.mubr.f32.mxu0 0.0
    %650 = vmatmul.mubr.f32.gmra.mrb[0].mxu0 %v583
    %v651 = vpop.f32.mrb[0].mxu0
    %v652 = vadd.f32 0.0, %v651
    %v653 = vpop.f32.mrb[0].mxu0
    %654 = vdwg.mxu0
    %v655 = vadd.f32 %v581, %v652
    %v656 = vtanh.pop %v655
    %s657 = scalar_lea.vmem [#allocation2], 48
    %v658 = vld [vmem:[%s657] sm:$0xff]
    %v660 = vsel %vm179, %v656, 0
    %662 = vmatprep.subr.mxu0 0.0
    %663 = vmatpush1.msra.mxu0 %v188
    %664 = vmatprep.subr.mxu0 0.0
    %665 = vmatpush1.msra.mxu0 %v189
    %666 = vmatprep.subr.mxu0 0.0
    %667 = vmatpush1.msra.mxu0 %v190
    %668 = vmatprep.subr.mxu0 0.0
    %669 = vmatpush1.msra.mxu0 %v191
    %670 = vmatprep.subr.mxu0 0.0
    %671 = vmatpush1.msra.mxu0 %v192
    %672 = vmatprep.subr.mxu0 0.0
    %673 = vmatpush1.msra.mxu0 %v193
    %674 = vmatprep.subr.mxu0 0.0
    %675 = vmatpush1.msra.mxu0 %v194
    %676 = vmatprep.subr.mxu0 0.0
    %677 = vmatpush1.msra.mxu0 %v195
    %678 = vmatprep.subr.mxu0 0.0
    %679 = vmatpush1.msra.mxu0 0.0
    %680 = vmatprep.subr.mxu0 0.0
    %681 = vmatpush1.msra.mxu0 0.0
    %682 = vmatprep.subr.mxu0 0.0
    %683 = vmatpush1.msra.mxu0 0.0
    %684 = vmatprep.subr.mxu0 0.0
    %685 = vmatpush1.msra.mxu0 0.0
    %686 = vmatprep.subr.mxu0 0.0
    %687 = vmatpush1.msra.mxu0 0.0
    %688 = vmatprep.subr.mxu0 0.0
    %689 = vmatpush1.msra.mxu0 0.0
    %690 = vmatprep.subr.mxu0 0.0
    %691 = vmatpush1.msra.mxu0 0.0
    %692 = vmatprep.subr.mxu0 0.0
    %693 = vmatpush1.msra.mxu0 0.0
    %694 = vmatprep.subr.mxu0 0.0
    %695 = vmatpush1.msra.mxu0 0.0
    %696 = vmatprep.subr.mxu0 0.0
    %697 = vmatpush1.msra.mxu0 0.0
    %698 = vmatprep.subr.mxu0 0.0
    %699 = vmatpush1.msra.mxu0 0.0
    %700 = vmatprep.subr.mxu0 0.0
    %701 = vmatpush1.msra.mxu0 0.0
    %702 = vmatprep.subr.mxu0 0.0
    %703 = vmatpush1.msra.mxu0 0.0
    %704 = vmatprep.subr.mxu0 0.0
    %705 = vmatpush1.msra.mxu0 0.0
    %706 = vmatprep.subr.mxu0 0.0
    %707 = vmatpush1.msra.mxu0 0.0
    %708 = vmatprep.subr.mxu0 0.0
    %709 = vmatpush1.msra.mxu0 0.0
    %710 = vmatprep.subr.mxu0 0.0
    %711 = vmatpush1.msra.mxu0 0.0
    %712 = vmatprep.subr.mxu0 0.0
    %713 = vmatpush1.msra.mxu0 0.0
    %714 = vmatprep.subr.mxu0 0.0
    %715 = vmatpush1.msra.mxu0 0.0
    %716 = vmatprep.subr.mxu0 0.0
    %717 = vmatpush1.msra.mxu0 0.0
    %718 = vmatprep.subr.mxu0 0.0
    %719 = vmatpush1.msra.mxu0 0.0
    %720 = vmatprep.subr.mxu0 0.0
    %721 = vmatpush1.msra.mxu0 0.0
    %722 = vmatprep.subr.mxu0 0.0
    %723 = vmatpush1.msra.mxu0 0.0
    %724 = vmatprep.subr.mxu0 0.0
    %725 = vmatpush1.msra.mxu0 0.0
    %726 = vmatprep.mubr.f32.mxu0 0.0
    %727 = vmatmul.mubr.f32.gmra.mrb[0].mxu0 %v660
    %v728 = vpop.f32.mrb[0].mxu0
    %v729 = vadd.f32 0.0, %v728
    %v730 = vpop.f32.mrb[0].mxu0
    %731 = vdwg.mxu0
    %v732 = vadd.f32 %v658, %v729
    %v733 = vtanh.pop %v732
    %s734 = scalar_lea.vmem [#allocation2], 56
    %v735 = vld [vmem:[%s734] sm:$0xff]
    %v737 = vsel %vm179, %v733, 0
    %739 = vmatprep.subr.mxu0 0.0
    %740 = vmatpush1.msra.mxu0 %v188
    %741 = vmatprep.subr.mxu0 0.0
    %742 = vmatpush1.msra.mxu0 %v189
    %743 = vmatprep.subr.mxu0 0.0
    %744 = vmatpush1.msra.mxu0 %v190
    %745 = vmatprep.subr.mxu0 0.0
    %746 = vmatpush1.msra.mxu0 %v191
    %747 = vmatprep.subr.mxu0 0.0
    %748 = vmatpush1.msra.mxu0 %v192
    %749 = vmatprep.subr.mxu0 0.0
    %750 = vmatpush1.msra.mxu0 %v193
    %751 = vmatprep.subr.mxu0 0.0
    %752 = vmatpush1.msra.mxu0 %v194
    %753 = vmatprep.subr.mxu0 0.0
    %754 = vmatpush1.msra.mxu0 %v195
    %755 = vmatprep.subr.mxu0 0.0
    %756 = vmatpush1.msra.mxu0 0.0
    %757 = vmatprep.subr.mxu0 0.0
    %758 = vmatpush1.msra.mxu0 0.0
    %759 = vmatprep.subr.mxu0 0.0
    %760 = vmatpush1.msra.mxu0 0.0
    %761 = vmatprep.subr.mxu0 0.0
    %762 = vmatpush1.msra.mxu0 0.0
    %763 = vmatprep.subr.mxu0 0.0
    %764 = vmatpush1.msra.mxu0 0.0
    %765 = vmatprep.subr.mxu0 0.0
    %766 = vmatpush1.msra.mxu0 0.0
    %767 = vmatprep.subr.mxu0 0.0
    %768 = vmatpush1.msra.mxu0 0.0
    %769 = vmatprep.subr.mxu0 0.0
    %770 = vmatpush1.msra.mxu0 0.0
    %771 = vmatprep.subr.mxu0 0.0
    %772 = vmatpush1.msra.mxu0 0.0
    %773 = vmatprep.subr.mxu0 0.0
    %774 = vmatpush1.msra.mxu0 0.0
    %775 = vmatprep.subr.mxu0 0.0
    %776 = vmatpush1.msra.mxu0 0.0
    %777 = vmatprep.subr.mxu0 0.0
    %778 = vmatpush1.msra.mxu0 0.0
    %779 = vmatprep.subr.mxu0 0.0
    %780 = vmatpush1.msra.mxu0 0.0
    %781 = vmatprep.subr.mxu0 0.0
    %782 = vmatpush1.msra.mxu0 0.0
    %783 = vmatprep.subr.mxu0 0.0
    %784 = vmatpush1.msra.mxu0 0.0
    %785 = vmatprep.subr.mxu0 0.0
    %786 = vmatpush1.msra.mxu0 0.0
    %787 = vmatprep.subr.mxu0 0.0
    %788 = vmatpush1.msra.mxu0 0.0
    %789 = vmatprep.subr.mxu0 0.0
    %790 = vmatpush1.msra.mxu0 0.0
    %791 = vmatprep.subr.mxu0 0.0
    %792 = vmatpush1.msra.mxu0 0.0
    %793 = vmatprep.subr.mxu0 0.0
    %794 = vmatpush1.msra.mxu0 0.0
    %795 = vmatprep.subr.mxu0 0.0
    %796 = vmatpush1.msra.mxu0 0.0
    %797 = vmatprep.subr.mxu0 0.0
    %798 = vmatpush1.msra.mxu0 0.0
    %799 = vmatprep.subr.mxu0 0.0
    %800 = vmatpush1.msra.mxu0 0.0
    %801 = vmatprep.subr.mxu0 0.0
    %802 = vmatpush1.msra.mxu0 0.0
    %803 = vmatprep.mubr.f32.mxu0 0.0
    %804 = vmatmul.mubr.f32.gmra.mrb[0].mxu0 %v737
    %v805 = vpop.f32.mrb[0].mxu0
    %v806 = vadd.f32 0.0, %v805
    %v807 = vpop.f32.mrb[0].mxu0
    %808 = vdwg.mxu0
    %v809 = vadd.f32 %v735, %v806
    %v810 = vtanh.pop %v809
    %v811 = vld [vmem:[%s4] sm:$0xff]
    %v812 = vld [vmem:[%s4 + $0x8] sm:$0xff]
    %v813 = vld [vmem:[%s4 + $0x10] sm:$0xff]
    %v814 = vld [vmem:[%s4 + $0x18] sm:$0xff]
    %v815 = vld [vmem:[%s4 + $0x20] sm:$0xff]
    %v816 = vld [vmem:[%s4 + $0x28] sm:$0xff]
    %v817 = vld [vmem:[%s4 + $0x30] sm:$0xff]
    %v818 = vld [vmem:[%s4 + $0x38] sm:$0xff]
    %v819 = vld [vmem:[%s5] sm:$0x1]
    %v821 = vlaneseq
    %v822 = vshrl.u32 %v821, 7
    %v823 = vsub.s32 0, %v822
    %v824 = vrot.slane %v819, %v823
    %v827 = vsel %vm179, %v810, 0
    %829 = vmatprep.subr.mxu0 0.0
    %830 = vmatpush1.msra.mxu0 %v811
    %831 = vmatprep.subr.mxu0 0.0
    %832 = vmatpush1.msra.mxu0 %v812
    %833 = vmatprep.subr.mxu0 0.0
    %834 = vmatpush1.msra.mxu0 %v813
    %835 = vmatprep.subr.mxu0 0.0
    %836 = vmatpush1.msra.mxu0 %v814
    %837 = vmatprep.subr.mxu0 0.0
    %838 = vmatpush1.msra.mxu0 %v815
    %839 = vmatprep.subr.mxu0 0.0
    %840 = vmatpush1.msra.mxu0 %v816
    %841 = vmatprep.subr.mxu0 0.0
    %842 = vmatpush1.msra.mxu0 %v817
    %843 = vmatprep.subr.mxu0 0.0
    %844 = vmatpush1.msra.mxu0 %v818
    %845 = vmatprep.subr.mxu0 0.0
    %846 = vmatpush1.msra.mxu0 0.0
    %847 = vmatprep.subr.mxu0 0.0
    %848 = vmatpush1.msra.mxu0 0.0
    %849 = vmatprep.subr.mxu0 0.0
    %850 = vmatpush1.msra.mxu0 0.0
    %851 = vmatprep.subr.mxu0 0.0
    %852 = vmatpush1.msra.mxu0 0.0
    %853 = vmatprep.subr.mxu0 0.0
    %854 = vmatpush1.msra.mxu0 0.0
    %855 = vmatprep.subr.mxu0 0.0
    %856 = vmatpush1.msra.mxu0 0.0
    %857 = vmatprep.subr.mxu0 0.0
    %858 = vmatpush1.msra.mxu0 0.0
    %859 = vmatprep.subr.mxu0 0.0
    %860 = vmatpush1.msra.mxu0 0.0
    %861 = vmatprep.subr.mxu0 0.0
    %862 = vmatpush1.msra.mxu0 0.0
    %863 = vmatprep.subr.mxu0 0.0
    %864 = vmatpush1.msra.mxu0 0.0
    %865 = vmatprep.subr.mxu0 0.0
    %866 = vmatpush1.msra.mxu0 0.0
    %867 = vmatprep.subr.mxu0 0.0
    %868 = vmatpush1.msra.mxu0 0.0
    %869 = vmatprep.subr.mxu0 0.0
    %870 = vmatpush1.msra.mxu0 0.0
    %871 = vmatprep.subr.mxu0 0.0
    %872 = vmatpush1.msra.mxu0 0.0
    %873 = vmatprep.subr.mxu0 0.0
    %874 = vmatpush1.msra.mxu0 0.0
    %875 = vmatprep.subr.mxu0 0.0
    %876 = vmatpush1.msra.mxu0 0.0
    %877 = vmatprep.subr.mxu0 0.0
    %878 = vmatpush1.msra.mxu0 0.0
    %879 = vmatprep.subr.mxu0 0.0
    %880 = vmatpush1.msra.mxu0 0.0
    %881 = vmatprep.subr.mxu0 0.0
    %882 = vmatpush1.msra.mxu0 0.0
    %883 = vmatprep.subr.mxu0 0.0
    %884 = vmatpush1.msra.mxu0 0.0
    %885 = vmatprep.subr.mxu0 0.0
    %886 = vmatpush1.msra.mxu0 0.0
    %887 = vmatprep.subr.mxu0 0.0
    %888 = vmatpush1.msra.mxu0 0.0
    %889 = vmatprep.subr.mxu0 0.0
    %890 = vmatpush1.msra.mxu0 0.0
    %891 = vmatprep.subr.mxu0 0.0
    %892 = vmatpush1.msra.mxu0 0.0
    %893 = vmatprep.mubr.f32.mxu0 0.0
    %894 = vmatmul.mubr.f32.gmra.mrb[0].mxu0 %v827
    %v895 = vpop.f32.mrb[0].mxu0
    %v896 = vadd.f32 %v824, %v895
    %v897 = vpop.f32.mrb[0].mxu0
    %898 = vdwg.mxu0
    %v899 = vmax.f32 %v896, 0.0
    %v900 = vld [vmem:[%s6] sm:$0xff]
    %v901 = vld [vmem:[%s6 + $0x8] sm:$0xff]
    %v902 = vld [vmem:[%s6 + $0x10] sm:$0xff]
    %v903 = vld [vmem:[%s6 + $0x18] sm:$0xff]
    %v904 = vld [vmem:[%s7] sm:$0x1]
    %v906 = vlaneseq
    %v907 = vshrl.u32 %v906, 7
    %v908 = vsub.s32 0, %v907
    %v909 = vrot.slane %v904, %v908
    %v912 = vsel %vm49, %v899, 0
    %914 = vmatprep.subr.mxu0 0.0
    %915 = vmatpush1.msra.mxu0 %v900
    %916 = vmatprep.subr.mxu0 0.0
    %917 = vmatpush1.msra.mxu0 %v901
    %918 = vmatprep.subr.mxu0 0.0
    %919 = vmatpush1.msra.mxu0 %v902
    %920 = vmatprep.subr.mxu0 0.0
    %921 = vmatpush1.msra.mxu0 %v903
    %922 = vmatprep.subr.mxu0 0.0
    %923 = vmatpush1.msra.mxu0 0.0
    %924 = vmatprep.subr.mxu0 0.0
    %925 = vmatpush1.msra.mxu0 0.0
    %926 = vmatprep.subr.mxu0 0.0
    %927 = vmatpush1.msra.mxu0 0.0
    %928 = vmatprep.subr.mxu0 0.0
    %929 = vmatpush1.msra.mxu0 0.0
    %930 = vmatprep.subr.mxu0 0.0
    %931 = vmatpush1.msra.mxu0 0.0
    %932 = vmatprep.subr.mxu0 0.0
    %933 = vmatpush1.msra.mxu0 0.0
    %934 = vmatprep.subr.mxu0 0.0
    %935 = vmatpush1.msra.mxu0 0.0
    %936 = vmatprep.subr.mxu0 0.0
    %937 = vmatpush1.msra.mxu0 0.0
    %938 = vmatprep.subr.mxu0 0.0
    %939 = vmatpush1.msra.mxu0 0.0
    %940 = vmatprep.subr.mxu0 0.0
    %941 = vmatpush1.msra.mxu0 0.0
    %942 = vmatprep.subr.mxu0 0.0
    %943 = vmatpush1.msra.mxu0 0.0
    %944 = vmatprep.subr.mxu0 0.0
    %945 = vmatpush1.msra.mxu0 0.0
    %946 = vmatprep.subr.mxu0 0.0
    %947 = vmatpush1.msra.mxu0 0.0
    %948 = vmatprep.subr.mxu0 0.0
    %949 = vmatpush1.msra.mxu0 0.0
    %950 = vmatprep.subr.mxu0 0.0
    %951 = vmatpush1.msra.mxu0 0.0
    %952 = vmatprep.subr.mxu0 0.0
    %953 = vmatpush1.msra.mxu0 0.0
    %954 = vmatprep.subr.mxu0 0.0
    %955 = vmatpush1.msra.mxu0 0.0
    %956 = vmatprep.subr.mxu0 0.0
    %957 = vmatpush1.msra.mxu0 0.0
    %958 = vmatprep.subr.mxu0 0.0
    %959 = vmatpush1.msra.mxu0 0.0
    %960 = vmatprep.subr.mxu0 0.0
    %961 = vmatpush1.msra.mxu0 0.0
    %962 = vmatprep.subr.mxu0 0.0
    %963 = vmatpush1.msra.mxu0 0.0
    %964 = vmatprep.subr.mxu0 0.0
    %965 = vmatpush1.msra.mxu0 0.0
    %966 = vmatprep.subr.mxu0 0.0
    %967 = vmatpush1.msra.mxu0 0.0
    %968 = vmatprep.subr.mxu0 0.0
    %969 = vmatpush1.msra.mxu0 0.0
    %970 = vmatprep.subr.mxu0 0.0
    %971 = vmatpush1.msra.mxu0 0.0
    %972 = vmatprep.subr.mxu0 0.0
    %973 = vmatpush1.msra.mxu0 0.0
    %974 = vmatprep.subr.mxu0 0.0
    %975 = vmatpush1.msra.mxu0 0.0
    %976 = vmatprep.subr.mxu0 0.0
    %977 = vmatpush1.msra.mxu0 0.0
    %978 = vmatprep.mubr.f32.mxu0 0.0
    %979 = vmatmul.mubr.f32.gmra.mrb[0].mxu0 %v912
    %v980 = vpop.f32.mrb[0].mxu0
    %v981 = vadd.f32 %v909, %v980
    %v982 = vpop.f32.mrb[0].mxu0
    %983 = vdwg.mxu0
    %984 = vst [vmem:[#allocation3] sm:$0xff] %v981
    // Predicated region
    $region34: #{rnn_pretrained_vecs_1.1} parent=1 // pred_check
      _
    $region35: #{rnn_pretrained_vecs_1.1} parent=1 // pred_check_branch
      %986 = sbr.rel (0) target = $region37
    $region36: #{rnn_pretrained_vecs_1.1} parent=1 // pred_region
      %s988 = ssub.s32 128, 128
      %989 = vsyncadd [#allocation4], %s988
      %s991 = sshll.u32 [#allocation3], 4
      %s992 = int_to_ptr.vmem [resolvable:$true] %s991
      %994 = dma.vmem_to_hbm [thread:$0]  %s992, 128, %s8, [#allocation4]
    $region37: #{rnn_pretrained_vecs_1.1} parent=1 // pred_fallthru
      _
    // Predicated region
    $region38: #{rnn_pretrained_vecs_1.1} parent=1 // pred_check
      _
    $region39: #{rnn_pretrained_vecs_1.1} parent=1 // pred_check_branch
      %996 = sbr.rel (0) target = $region41
    $region40: #{rnn_pretrained_vecs_1.1} parent=1 // pred_region
      %997 = dma.done [#allocation4], 128
    $region41: #{rnn_pretrained_vecs_1.1} parent=1 // pred_fallthru
      _
    %998 = vsyncpa [#allocation4], 1

</llo_original>
